<compile_context>
chip_gen: v5e
topology: v5e:2x2
jax: 0.10.0
libtpu: 0.0.40
codegen_flags: <defaults>
</compile_context>

<pallas_src>
from functools import reduce

import jax
import jax.numpy as jnp
from jax.experimental import pallas as pl
from jax.experimental.pallas import tpu as pltpu


def _round_up(x, m):
    return ((x + m - 1) // m) * m


# ---------------------------------------------------------------------------
# Pallas kernel: fused  act = x @ W + b ; logits = log_softmax(act)
# ---------------------------------------------------------------------------
def _categorical_kernel(x_ref, w_ref, b_ref, logits_ref):
    # matmul on the MXU, accumulate in f32
    act = jnp.dot(x_ref[...], w_ref[...], preferred_element_type=jnp.float32)
    act = act + b_ref[...]  # bias broadcast over batch rows (zero-init in module)

    # numerically stable log-softmax (torch Categorical's normalized logits)
    m = jnp.max(act, axis=-1, keepdims=True)
    shifted = act - m
    sum_exp = jnp.sum(jnp.exp(shifted), axis=-1, keepdims=True)
    logits_ref[...] = (shifted - jnp.log(sum_exp)).astype(logits_ref.dtype)


def _choose_tile_b(B, D_in, D_out, max_tile_b=2048, vmem_budget=24 << 20):
    """Batch tile sized against a v7x-safe VMEM budget; >=2 tiles when B permits."""
    d_out_l = _round_up(D_out, 128)            # narrow blocks are lane-padded in VMEM
    static = (D_in + 8) * d_out_l * 4          # resident W (single-buffered) + bias
    per_row = 2 * (D_in + d_out_l) * 4         # double-buffered x tile + logits tile
    cap = max(8, ((vmem_budget - static) // per_row) // 8 * 8)
    max_tile_b = min(max_tile_b, cap)
    # keep the grid length >= 2 for batches that would otherwise make a single
    # big tile: v7x's two TensorCores split the "parallel" batch axis.
    n_tiles = max(pl.cdiv(B, max_tile_b), 2 if B >= 16 else 1)
    tb = min(max_tile_b, _round_up(pl.cdiv(B, n_tiles), 8))
    return tb


def categorical_forward(x_flat, w_t, b):
    """x_flat: (B, D_in) f32, w_t: (D_in, D_out) f32, b: (1, D_out) f32."""
    B, D_in = x_flat.shape
    D_out = w_t.shape[1]

    tb = _choose_tile_b(B, D_in, D_out)
    grid = (pl.cdiv(B, tb),)  # last block may be partial: garbage rows are
                              # row-independent and their writes are masked.

    d_out_l = _round_up(D_out, 128)
    vmem_bytes = (2 * tb * D_in * 4            # x stream, double-buffered
                  + 2 * tb * d_out_l * 4       # logits writeback, double-buffered
                  + (D_in + 8) * d_out_l * 4)  # resident W + bias
    vmem_limit = min(int(vmem_bytes) + (8 << 20), 96 << 20)

    logits = pl.pallas_call(
        _categorical_kernel,
        out_shape=jax.ShapeDtypeStruct((B, D_out), jnp.float32),
        grid=grid,
        in_specs=[
            pl.BlockSpec((tb, D_in), lambda i: (i, 0)),       # streamed, pipelined
            pl.BlockSpec((D_in, D_out), lambda i: (0, 0),
                         pipeline_mode=pl.Buffered(1)),       # resident weights
            pl.BlockSpec((1, D_out), lambda i: (0, 0),
                         pipeline_mode=pl.Buffered(1)),       # resident bias
        ],
        out_specs=pl.BlockSpec((tb, D_out), lambda i: (i, 0)),
        compiler_params=pltpu.CompilerParams(
            dimension_semantics=("parallel",),                # shard tiles across TCs
            vmem_limit_bytes=vmem_limit,
        ),
    )(x_flat, w_t, b)
    return logits


# ---------------------------------------------------------------------------
# FixedCategorical equivalent (thin JAX glue over the kernel output)
# ---------------------------------------------------------------------------
class FixedCategoricalJax:
    def __init__(self, logits):
        self.logits = logits   # normalized log-probs, shape (B, D_out)
        self._probs = None     # lazily materialized (matches torch Categorical)

    @property
    def probs(self):
        if self._probs is None:
            self._probs = jnp.exp(self.logits)
        return self._probs

    def mode(self):
        # argmax(probs) == argmax(logits); no need to materialize probs
        return jnp.argmax(self.logits, axis=-1, keepdims=True)

    def log_probs(self, actions):
        # actions: (B, 1) int — gather normalized logit, sum over trailing, keep last dim
        a = jnp.squeeze(actions, axis=-1)
        lp = jnp.take_along_axis(self.logits, a[:, None], axis=-1)[:, 0]
        return lp.reshape(actions.shape[0], -1).sum(-1)[:, None]

    # TODO(synk): sample() requires a stateful RNG draw; omitted from the kernel path.


# ---------------------------------------------------------------------------
# Module wrapper: deterministic parameter init (orthogonal, relu gain; bias=0)
# ---------------------------------------------------------------------------
class CategoricalPallas:
    def __init__(self, input_shape, output_shape, key):
        self.input_size = reduce(lambda a, b: a * b, input_shape)
        self.output_size = reduce(lambda a, b: a * b, output_shape)
        gain = 2.0 ** 0.5  # nn.init.calculate_gain('relu')
        # torch nn.Linear weight is (out, in); orthogonal init on that shape.
        w = jax.nn.initializers.orthogonal(scale=gain)(
            key, (self.output_size, self.input_size), jnp.float32
        )
        self.w_t = jnp.asarray(w).T                      # (D_in, D_out)
        self.b = jnp.zeros((1, self.output_size), jnp.float32)

    def __call__(self, x):
        x_flat = x.reshape(-1, self.input_size).astype(jnp.float32)
        logits = categorical_forward(x_flat, self.w_t, self.b)
        return FixedCategoricalJax(logits)


if __name__ == "__main__":
    key = jax.random.PRNGKey(0)
    k_param, k_x, k_big = jax.random.split(key, 3)

    # NCHW-style observation: batch=2, channels=4, spatial=16x16 -> input_size=1024
    input_shape = (4, 16, 16)
    output_shape = (8,)  # 8 discrete actions
    x = jax.random.normal(k_x, (2,) + input_shape, dtype=jnp.float32)

    model = CategoricalPallas(input_shape, output_shape, k_param)
    dist = model(x)
    jax.block_until_ready(dist.logits)

    # sanity checks against a pure-JAX reference (small batch)
    x_flat = x.reshape(-1, model.input_size)
    ref_act = x_flat @ model.w_t + model.b
    ref_logits = jax.nn.log_softmax(ref_act, axis=-1)
    ref_probs = jax.nn.softmax(ref_act, axis=-1)
    assert jnp.allclose(dist.logits, ref_logits, atol=1e-5, rtol=1e-5)
    assert jnp.allclose(dist.probs, ref_probs, atol=1e-5, rtol=1e-5)
    assert dist.mode().shape == (2, 1)
    assert dist.log_probs(dist.mode()).shape == (2, 1)

    # multi-tile + partial final block path: B=520 -> tb=264, grid=(2,), the
    # second block carries 8 masked garbage rows that are never written back.
    xb = jax.random.normal(k_big, (520,) + input_shape, dtype=jnp.float32)
    dist_b = model(xb)
    jax.block_until_ready(dist_b.logits)
    xb_flat = xb.reshape(-1, model.input_size)
    ref_b = jax.nn.log_softmax(xb_flat @ model.w_t + model.b, axis=-1)
    assert dist_b.logits.shape == (520, 8)
    assert jnp.all(jnp.isfinite(dist_b.logits))
    assert jnp.allclose(dist_b.logits, ref_b, atol=1e-5, rtol=1e-5)

    print("KERNEL_OK")
</pallas_src>

<mosaic_0001>
module attributes {stable_mosaic.version = 11 : i64} {
  func.func @_categorical_kernel(%arg0: i32, %arg1: memref<8x1024xf32, #tpu.memory_space<vmem>>, %arg2: memref<1024x8xf32, #tpu.memory_space<vmem>>, %arg3: memref<1x8xf32, #tpu.memory_space<vmem>>, %arg4: memref<8x8xf32, #tpu.memory_space<vmem>>) attributes {dimension_semantics = [#tpu.dimension_semantics<parallel>], iteration_bounds = array<i64: 1>, scalar_prefetch = 0 : i64, scratch_operands = 0 : i64, tpu.core_type = #tpu.core_type<tc>, window_params = [{transform_indices = @transform_0, window_bounds = array<i64: 8, 1024>}, {pipeline_mode = #tpu.pipeline_mode<synchronous>, transform_indices = @transform_1, window_bounds = array<i64: 1024, 8>}, {pipeline_mode = #tpu.pipeline_mode<synchronous>, transform_indices = @transform_2, window_bounds = array<i64: 1, 8>}, {transform_indices = @transform_3, window_bounds = array<i64: 8, 8>}]} {
    %c0 = arith.constant 0 : index
    %c0_0 = arith.constant 0 : index
    %0 = vector.load %arg1[%c0, %c0_0] : memref<8x1024xf32, #tpu.memory_space<vmem>>, vector<8x1024xf32>
    %c0_1 = arith.constant 0 : index
    %c0_2 = arith.constant 0 : index
    %1 = vector.load %arg2[%c0_1, %c0_2] : memref<1024x8xf32, #tpu.memory_space<vmem>>, vector<1024x8xf32>
    %cst = arith.constant dense<0.000000e+00> : vector<8x8xf32>
    %2 = tpu.matmul %0, %1, %cst {dimension_numbers = #tpu.dot_dimension_numbers<[1], [0], [0], [1], [0, 0, 1, 1], [], []>} : vector<8x1024xf32>, vector<1024x8xf32>, vector<8x8xf32> -> vector<8x8xf32>
    %c0_3 = arith.constant 0 : index
    %c0_4 = arith.constant 0 : index
    %3 = vector.load %arg3[%c0_3, %c0_4] : memref<1x8xf32, #tpu.memory_space<vmem>>, vector<1x8xf32>
    %4 = vector.broadcast %3 : vector<1x8xf32> to vector<8x8xf32>
    %5 = arith.addf %2, %4 : vector<8x8xf32>
    %cst_5 = arith.constant dense<0xFF800000> : vector<8xf32>
    %6 = vector.multi_reduction <maximumf>, %5, %cst_5 [1] : vector<8x8xf32> to vector<8xf32>
    %7 = vector.shape_cast %6 : vector<8xf32> to vector<8x1xf32>
    %8 = vector.broadcast %7 : vector<8x1xf32> to vector<8x8xf32>
    %9 = arith.subf %5, %8 : vector<8x8xf32>
    %10 = math.exp %9 : vector<8x8xf32>
    %cst_6 = arith.constant dense<0.000000e+00> : vector<8xf32>
    %11 = vector.multi_reduction <add>, %10, %cst_6 [1] : vector<8x8xf32> to vector<8xf32>
    %12 = vector.shape_cast %11 : vector<8xf32> to vector<8x1xf32>
    %13 = math.log %12 : vector<8x1xf32>
    %14 = vector.broadcast %13 : vector<8x1xf32> to vector<8x8xf32>
    %15 = arith.subf %9, %14 : vector<8x8xf32>
    %c0_7 = arith.constant 0 : index
    %c0_8 = arith.constant 0 : index
    %16 = vector.load %arg4[%c0_7, %c0_8] : memref<8x8xf32, #tpu.memory_space<vmem>>, vector<8x8xf32>
    tpu.vector_store %arg4[%c0_7, %c0_8], %15 {strides = array<i32>} : memref<8x8xf32, #tpu.memory_space<vmem>>, vector<8x8xf32>,
    return
  }
  func.func @transform_0(%arg0: i32) -> (i32, i32) {
    %c0_i32 = arith.constant 0 : i32
    %c0_i32_0 = arith.constant 0 : i32
    return %arg0, %c0_i32 : i32, i32
  }
  func.func @transform_1(%arg0: i32) -> (i32, i32) {
    %c0_i32 = arith.constant 0 : i32
    %c0_i32_0 = arith.constant 0 : i32
    %c0_i32_1 = arith.constant 0 : i32
    return %c0_i32, %c0_i32_0 : i32, i32
  }
  func.func @transform_2(%arg0: i32) -> (i32, i32) {
    %c0_i32 = arith.constant 0 : i32
    %c0_i32_0 = arith.constant 0 : i32
    %c0_i32_1 = arith.constant 0 : i32
    return %c0_i32, %c0_i32_0 : i32, i32
  }
  func.func @transform_3(%arg0: i32) -> (i32, i32) {
    %c0_i32 = arith.constant 0 : i32
    %c0_i32_0 = arith.constant 0 : i32
    return %arg0, %c0_i32 : i32, i32
  }
}

</mosaic_0001>

<llo_original>
// kernel: tpu_custom_call.1
$region0: #{tpu_custom_call.1}
  #allocation0 [shape = 'u32[]', space=smem, size = 0x4, offset = 0x4, fixed_abs, tag = 'smem constant byte address 0x4 - core index']
  #allocation1 [shape = 'u32[72,128]{1,0:T(1,128)}', space=vmem, size = 0x9000, scoped, tag = 'internal scratch']
  %s0 = inlined_call_operand.vmem [shape: f32[2,1024], index: 0, kind: input, shape index: {}]
  %s1 = inlined_call_operand.vmem [shape: f32[1024,8], index: 1, kind: input, shape index: {}]
  %s2 = inlined_call_operand.vmem [shape: f32[1,8], index: 2, kind: input, shape index: {}]
  %s3 = inlined_call_operand.hbm [shape: f32[2,8], index: 3, kind: output, shape index: {}]
  %s4 = sld [smem:[#allocation0]]
  $region22: #{tpu_custom_call.1} parent=0
    _
  %s6 = ssub.s32 1, %s4
  %s7 = scalar_select 0, %s6, %s4
  $region1: #{tpu_custom_call.1} parent=0
    #allocation2 [shape = 'u8[4096]{0}', space=vmem, size = 0x1000, scoped, tag = 'output window, operand 0, single buffered']
    #allocation3 [shape = 's32[1]{0}', space=sflag, size = 0x4, scoped, tag = 'scoped memory for tpu_custom_call.1']
    %8 = vsyncpa [#allocation3], 0
    // Predicated region
    $region2: #{tpu_custom_call.1} parent=1 // pred_check
      _
    $region3: #{tpu_custom_call.1} parent=1 // pred_check_branch
      %10 = sbr.rel (0) target = $region5
    $region4: #{tpu_custom_call.1} parent=1 // pred_region
      _
    $region5: #{tpu_custom_call.1} parent=1 // pred_fallthru
      _
    // Predicated region
    $region6: #{tpu_custom_call.1} parent=1 // pred_check
      _
    $region7: #{tpu_custom_call.1} parent=1 // pred_check_branch
      %12 = sbr.rel (0) target = $region9
    $region8: #{tpu_custom_call.1} parent=1 // pred_region
      _
    $region9: #{tpu_custom_call.1} parent=1 // pred_fallthru
      _
    // Predicated region
    $region10: #{tpu_custom_call.1} parent=1 // pred_check
      _
    $region11: #{tpu_custom_call.1} parent=1 // pred_check_branch
      %14 = sbr.rel (0) target = $region13
    $region12: #{tpu_custom_call.1} parent=1 // pred_region
      _
    $region13: #{tpu_custom_call.1} parent=1 // pred_fallthru
      _
    %v15 = vld [vmem:[%s0] sm:$0xff]
    %v16 = vld [vmem:[%s0 + $0x8] sm:$0xff]
    %v17 = vld [vmem:[%s0 + $0x10] sm:$0xff]
    %v18 = vld [vmem:[%s0 + $0x18] sm:$0xff]
    %v19 = vld [vmem:[%s0 + $0x20] sm:$0xff]
    %v20 = vld [vmem:[%s0 + $0x28] sm:$0xff]
    %v21 = vld [vmem:[%s0 + $0x30] sm:$0xff]
    %v22 = vld [vmem:[%s0 + $0x38] sm:$0xff]
    %v23 = vld [vmem:[%s1] sm:$0xff]
    %v24 = vld [vmem:[%s1 + $0x8] sm:$0xff]
    %v25 = vld [vmem:[%s1 + $0x10] sm:$0xff]
    %v26 = vld [vmem:[%s1 + $0x18] sm:$0xff]
    %v27 = vld [vmem:[%s1 + $0x20] sm:$0xff]
    %v28 = vld [vmem:[%s1 + $0x28] sm:$0xff]
    %v29 = vld [vmem:[%s1 + $0x30] sm:$0xff]
    %v30 = vld [vmem:[%s1 + $0x38] sm:$0xff]
    %v31 = vld [vmem:[%s1 + $0x40] sm:$0xff]
    %v32 = vld [vmem:[%s1 + $0x48] sm:$0xff]
    %v33 = vld [vmem:[%s1 + $0x50] sm:$0xff]
    %v34 = vld [vmem:[%s1 + $0x58] sm:$0xff]
    %v35 = vld [vmem:[%s1 + $0x60] sm:$0xff]
    %v36 = vld [vmem:[%s1 + $0x68] sm:$0xff]
    %v37 = vld [vmem:[%s1 + $0x70] sm:$0xff]
    %v38 = vld [vmem:[%s1 + $0x78] sm:$0xff]
    %v39 = vld [vmem:[%s1 + $0x80] sm:$0xff]
    %v40 = vld [vmem:[%s1 + $0x88] sm:$0xff]
    %v41 = vld [vmem:[%s1 + $0x90] sm:$0xff]
    %v42 = vld [vmem:[%s1 + $0x98] sm:$0xff]
    %v43 = vld [vmem:[%s1 + $0xa0] sm:$0xff]
    %v44 = vld [vmem:[%s1 + $0xa8] sm:$0xff]
    %v45 = vld [vmem:[%s1 + $0xb0] sm:$0xff]
    %v46 = vld [vmem:[%s1 + $0xb8] sm:$0xff]
    %v47 = vld [vmem:[%s1 + $0xc0] sm:$0xff]
    %v48 = vld [vmem:[%s1 + $0xc8] sm:$0xff]
    %v49 = vld [vmem:[%s1 + $0xd0] sm:$0xff]
    %v50 = vld [vmem:[%s1 + $0xd8] sm:$0xff]
    %v51 = vld [vmem:[%s1 + $0xe0] sm:$0xff]
    %v52 = vld [vmem:[%s1 + $0xe8] sm:$0xff]
    %v53 = vld [vmem:[%s1 + $0xf0] sm:$0xff]
    %v54 = vld [vmem:[%s1 + $0xf8] sm:$0xff]
    %v55 = vld [vmem:[%s1 + $0x100] sm:$0xff]
    %v56 = vld [vmem:[%s1 + $0x108] sm:$0xff]
    %v57 = vld [vmem:[%s1 + $0x110] sm:$0xff]
    %v58 = vld [vmem:[%s1 + $0x118] sm:$0xff]
    %v59 = vld [vmem:[%s1 + $0x120] sm:$0xff]
    %v60 = vld [vmem:[%s1 + $0x128] sm:$0xff]
    %v61 = vld [vmem:[%s1 + $0x130] sm:$0xff]
    %v62 = vld [vmem:[%s1 + $0x138] sm:$0xff]
    %v63 = vld [vmem:[%s1 + $0x140] sm:$0xff]
    %v64 = vld [vmem:[%s1 + $0x148] sm:$0xff]
    %v65 = vld [vmem:[%s1 + $0x150] sm:$0xff]
    %v66 = vld [vmem:[%s1 + $0x158] sm:$0xff]
    %v67 = vld [vmem:[%s1 + $0x160] sm:$0xff]
    %v68 = vld [vmem:[%s1 + $0x168] sm:$0xff]
    %v69 = vld [vmem:[%s1 + $0x170] sm:$0xff]
    %v70 = vld [vmem:[%s1 + $0x178] sm:$0xff]
    %v71 = vld [vmem:[%s1 + $0x180] sm:$0xff]
    %v72 = vld [vmem:[%s1 + $0x188] sm:$0xff]
    %v73 = vld [vmem:[%s1 + $0x190] sm:$0xff]
    %v74 = vld [vmem:[%s1 + $0x198] sm:$0xff]
    %v75 = vld [vmem:[%s1 + $0x1a0] sm:$0xff]
    %v76 = vld [vmem:[%s1 + $0x1a8] sm:$0xff]
    %v77 = vld [vmem:[%s1 + $0x1b0] sm:$0xff]
    %v78 = vld [vmem:[%s1 + $0x1b8] sm:$0xff]
    %v79 = vld [vmem:[%s1 + $0x1c0] sm:$0xff]
    %v80 = vld [vmem:[%s1 + $0x1c8] sm:$0xff]
    %v81 = vld [vmem:[%s1 + $0x1d0] sm:$0xff]
    %v82 = vld [vmem:[%s1 + $0x1d8] sm:$0xff]
    %v83 = vld [vmem:[%s1 + $0x1e0] sm:$0xff]
    %v84 = vld [vmem:[%s1 + $0x1e8] sm:$0xff]
    %v85 = vld [vmem:[%s1 + $0x1f0] sm:$0xff]
    %v86 = vld [vmem:[%s1 + $0x1f8] sm:$0xff]
    %v87 = vld [vmem:[%s1 + $0x200] sm:$0xff]
    %v88 = vld [vmem:[%s1 + $0x208] sm:$0xff]
    %v89 = vld [vmem:[%s1 + $0x210] sm:$0xff]
    %v90 = vld [vmem:[%s1 + $0x218] sm:$0xff]
    %v91 = vld [vmem:[%s1 + $0x220] sm:$0xff]
    %v92 = vld [vmem:[%s1 + $0x228] sm:$0xff]
    %v93 = vld [vmem:[%s1 + $0x230] sm:$0xff]
    %v94 = vld [vmem:[%s1 + $0x238] sm:$0xff]
    %v95 = vld [vmem:[%s1 + $0x240] sm:$0xff]
    %v96 = vld [vmem:[%s1 + $0x248] sm:$0xff]
    %v97 = vld [vmem:[%s1 + $0x250] sm:$0xff]
    %v98 = vld [vmem:[%s1 + $0x258] sm:$0xff]
    %v99 = vld [vmem:[%s1 + $0x260] sm:$0xff]
    %v100 = vld [vmem:[%s1 + $0x268] sm:$0xff]
    %v101 = vld [vmem:[%s1 + $0x270] sm:$0xff]
    %v102 = vld [vmem:[%s1 + $0x278] sm:$0xff]
    %v103 = vld [vmem:[%s1 + $0x280] sm:$0xff]
    %v104 = vld [vmem:[%s1 + $0x288] sm:$0xff]
    %v105 = vld [vmem:[%s1 + $0x290] sm:$0xff]
    %v106 = vld [vmem:[%s1 + $0x298] sm:$0xff]
    %v107 = vld [vmem:[%s1 + $0x2a0] sm:$0xff]
    %v108 = vld [vmem:[%s1 + $0x2a8] sm:$0xff]
    %v109 = vld [vmem:[%s1 + $0x2b0] sm:$0xff]
    %v110 = vld [vmem:[%s1 + $0x2b8] sm:$0xff]
    %v111 = vld [vmem:[%s1 + $0x2c0] sm:$0xff]
    %v112 = vld [vmem:[%s1 + $0x2c8] sm:$0xff]
    %v113 = vld [vmem:[%s1 + $0x2d0] sm:$0xff]
    %v114 = vld [vmem:[%s1 + $0x2d8] sm:$0xff]
    %v115 = vld [vmem:[%s1 + $0x2e0] sm:$0xff]
    %v116 = vld [vmem:[%s1 + $0x2e8] sm:$0xff]
    %v117 = vld [vmem:[%s1 + $0x2f0] sm:$0xff]
    %v118 = vld [vmem:[%s1 + $0x2f8] sm:$0xff]
    %v119 = vld [vmem:[%s1 + $0x300] sm:$0xff]
    %v120 = vld [vmem:[%s1 + $0x308] sm:$0xff]
    %v121 = vld [vmem:[%s1 + $0x310] sm:$0xff]
    %v122 = vld [vmem:[%s1 + $0x318] sm:$0xff]
    %v123 = vld [vmem:[%s1 + $0x320] sm:$0xff]
    %v124 = vld [vmem:[%s1 + $0x328] sm:$0xff]
    %v125 = vld [vmem:[%s1 + $0x330] sm:$0xff]
    %v126 = vld [vmem:[%s1 + $0x338] sm:$0xff]
    %v127 = vld [vmem:[%s1 + $0x340] sm:$0xff]
    %v128 = vld [vmem:[%s1 + $0x348] sm:$0xff]
    %v129 = vld [vmem:[%s1 + $0x350] sm:$0xff]
    %v130 = vld [vmem:[%s1 + $0x358] sm:$0xff]
    %v131 = vld [vmem:[%s1 + $0x360] sm:$0xff]
    %v132 = vld [vmem:[%s1 + $0x368] sm:$0xff]
    %v133 = vld [vmem:[%s1 + $0x370] sm:$0xff]
    %v134 = vld [vmem:[%s1 + $0x378] sm:$0xff]
    %v135 = vld [vmem:[%s1 + $0x380] sm:$0xff]
    %v136 = vld [vmem:[%s1 + $0x388] sm:$0xff]
    %v137 = vld [vmem:[%s1 + $0x390] sm:$0xff]
    %v138 = vld [vmem:[%s1 + $0x398] sm:$0xff]
    %v139 = vld [vmem:[%s1 + $0x3a0] sm:$0xff]
    %v140 = vld [vmem:[%s1 + $0x3a8] sm:$0xff]
    %v141 = vld [vmem:[%s1 + $0x3b0] sm:$0xff]
    %v142 = vld [vmem:[%s1 + $0x3b8] sm:$0xff]
    %v143 = vld [vmem:[%s1 + $0x3c0] sm:$0xff]
    %v144 = vld [vmem:[%s1 + $0x3c8] sm:$0xff]
    %v145 = vld [vmem:[%s1 + $0x3d0] sm:$0xff]
    %v146 = vld [vmem:[%s1 + $0x3d8] sm:$0xff]
    %v147 = vld [vmem:[%s1 + $0x3e0] sm:$0xff]
    %v148 = vld [vmem:[%s1 + $0x3e8] sm:$0xff]
    %v149 = vld [vmem:[%s1 + $0x3f0] sm:$0xff]
    %v150 = vld [vmem:[%s1 + $0x3f8] sm:$0xff]
    %v151 = vld [vmem:[%s2] sm:$0x1]
    %v153 = vperm.slane %v151, 0
    %163 = vst [vmem:[#allocation1] ss:$4 sm:$0xff] %v15
    %s164 = scalar_lea.vmem [#allocation1], 1
    %165 = vst [vmem:[%s164] ss:$4 sm:$0xff] %v17
    %s166 = scalar_lea.vmem [#allocation1], 2
    %167 = vst [vmem:[%s166] ss:$4 sm:$0xff] %v19
    %s168 = scalar_lea.vmem [#allocation1], 3
    %169 = vst [vmem:[%s168] ss:$4 sm:$0xff] %v21
    %s170 = scalar_lea.vmem [#allocation1], 32
    %171 = vst [vmem:[%s170] ss:$4 sm:$0xff] %v16
    %s172 = scalar_lea.vmem [#allocation1], 33
    %173 = vst [vmem:[%s172] ss:$4 sm:$0xff] %v18
    %s174 = scalar_lea.vmem [#allocation1], 34
    %175 = vst [vmem:[%s174] ss:$4 sm:$0xff] %v20
    %s176 = scalar_lea.vmem [#allocation1], 35
    %177 = vst [vmem:[%s176] ss:$4 sm:$0xff] %v22
    %v178 = vld.sshfl [vmem:[#allocation1] sm:$0xff pattern:$0x73625140]
    %v179 = vld.sshfl [vmem:[#allocation1 + $0x8] sm:$0xff pattern:$0x73625140]
    %v180 = vld.sshfl [vmem:[#allocation1 + $0x10] sm:$0xff pattern:$0x73625140]
    %v181 = vld.sshfl [vmem:[#allocation1 + $0x18] sm:$0xff pattern:$0x73625140]
    %v182 = vld.sshfl [vmem:[#allocation1 + $0x20] sm:$0xff pattern:$0x73625140]
    %v183 = vld.sshfl [vmem:[#allocation1 + $0x28] sm:$0xff pattern:$0x73625140]
    %v184 = vld.sshfl [vmem:[#allocation1 + $0x30] sm:$0xff pattern:$0x73625140]
    %v185 = vld.sshfl [vmem:[#allocation1 + $0x38] sm:$0xff pattern:$0x73625140]
    %194 = vmatpush.msra.mxu0 %v38
    %195 = vmatpush.msra.mxu0 %v37
    %196 = vmatpush.msra.mxu0 %v36
    %197 = vmatpush.msra.mxu0 %v35
    %198 = vmatpush.msra.mxu0 %v34
    %199 = vmatpush.msra.mxu0 %v33
    %200 = vmatpush.msra.mxu0 %v32
    %201 = vmatpush.msra.mxu0 %v31
    %202 = vmatpush.msra.mxu0 %v30
    %203 = vmatpush.msra.mxu0 %v29
    %204 = vmatpush.msra.mxu0 %v28
    %205 = vmatpush.msra.mxu0 %v27
    %206 = vmatpush.msra.mxu0 %v26
    %207 = vmatpush.msra.mxu0 %v25
    %208 = vmatpush.msra.mxu0 %v24
    %209 = vmatpush.msra.mxu0 %v23
    %210 = vmatmul.f32.gmra.mxu0 %v178
    %v211 = vpop.f32.mrf.mxu0
    %v212 = vadd.f32 %v153, %v211
    %213 = vdwg.mxu0
    %214 = vmatpush.msra.mxu0 %v54
    %215 = vmatpush.msra.mxu0 %v53
    %216 = vmatpush.msra.mxu0 %v52
    %217 = vmatpush.msra.mxu0 %v51
    %218 = vmatpush.msra.mxu0 %v50
    %219 = vmatpush.msra.mxu0 %v49
    %220 = vmatpush.msra.mxu0 %v48
    %221 = vmatpush.msra.mxu0 %v47
    %222 = vmatpush.msra.mxu0 %v46
    %223 = vmatpush.msra.mxu0 %v45
    %224 = vmatpush.msra.mxu0 %v44
    %225 = vmatpush.msra.mxu0 %v43
    %226 = vmatpush.msra.mxu0 %v42
    %227 = vmatpush.msra.mxu0 %v41
    %228 = vmatpush.msra.mxu0 %v40
    %229 = vmatpush.msra.mxu0 %v39
    %230 = vmatmul.f32.gmra.mxu0 %v179
    %v231 = vpop.f32.mrf.mxu0
    %v232 = vadd.f32 %v212, %v231
    %233 = vdwg.mxu0
    %234 = vmatpush.msra.mxu0 %v70
    %235 = vmatpush.msra.mxu0 %v69
    %236 = vmatpush.msra.mxu0 %v68
    %237 = vmatpush.msra.mxu0 %v67
    %238 = vmatpush.msra.mxu0 %v66
    %239 = vmatpush.msra.mxu0 %v65
    %240 = vmatpush.msra.mxu0 %v64
    %241 = vmatpush.msra.mxu0 %v63
    %242 = vmatpush.msra.mxu0 %v62
    %243 = vmatpush.msra.mxu0 %v61
    %244 = vmatpush.msra.mxu0 %v60
    %245 = vmatpush.msra.mxu0 %v59
    %246 = vmatpush.msra.mxu0 %v58
    %247 = vmatpush.msra.mxu0 %v57
    %248 = vmatpush.msra.mxu0 %v56
    %249 = vmatpush.msra.mxu0 %v55
    %250 = vmatmul.f32.gmra.mxu0 %v180
    %v251 = vpop.f32.mrf.mxu0
    %v252 = vadd.f32 %v232, %v251
    %253 = vdwg.mxu0
    %254 = vmatpush.msra.mxu0 %v86
    %255 = vmatpush.msra.mxu0 %v85
    %256 = vmatpush.msra.mxu0 %v84
    %257 = vmatpush.msra.mxu0 %v83
    %258 = vmatpush.msra.mxu0 %v82
    %259 = vmatpush.msra.mxu0 %v81
    %260 = vmatpush.msra.mxu0 %v80
    %261 = vmatpush.msra.mxu0 %v79
    %262 = vmatpush.msra.mxu0 %v78
    %263 = vmatpush.msra.mxu0 %v77
    %264 = vmatpush.msra.mxu0 %v76
    %265 = vmatpush.msra.mxu0 %v75
    %266 = vmatpush.msra.mxu0 %v74
    %267 = vmatpush.msra.mxu0 %v73
    %268 = vmatpush.msra.mxu0 %v72
    %269 = vmatpush.msra.mxu0 %v71
    %270 = vmatmul.f32.gmra.mxu0 %v181
    %v271 = vpop.f32.mrf.mxu0
    %v272 = vadd.f32 %v252, %v271
    %273 = vdwg.mxu0
    %274 = vmatpush.msra.mxu0 %v102
    %275 = vmatpush.msra.mxu0 %v101
    %276 = vmatpush.msra.mxu0 %v100
    %277 = vmatpush.msra.mxu0 %v99
    %278 = vmatpush.msra.mxu0 %v98
    %279 = vmatpush.msra.mxu0 %v97
    %280 = vmatpush.msra.mxu0 %v96
    %281 = vmatpush.msra.mxu0 %v95
    %282 = vmatpush.msra.mxu0 %v94
    %283 = vmatpush.msra.mxu0 %v93
    %284 = vmatpush.msra.mxu0 %v92
    %285 = vmatpush.msra.mxu0 %v91
    %286 = vmatpush.msra.mxu0 %v90
    %287 = vmatpush.msra.mxu0 %v89
    %288 = vmatpush.msra.mxu0 %v88
    %289 = vmatpush.msra.mxu0 %v87
    %290 = vmatmul.f32.gmra.mxu0 %v182
    %v291 = vpop.f32.mrf.mxu0
    %v292 = vadd.f32 %v272, %v291
    %293 = vdwg.mxu0
    %294 = vmatpush.msra.mxu0 %v118
    %295 = vmatpush.msra.mxu0 %v117
    %296 = vmatpush.msra.mxu0 %v116
    %297 = vmatpush.msra.mxu0 %v115
    %298 = vmatpush.msra.mxu0 %v114
    %299 = vmatpush.msra.mxu0 %v113
    %300 = vmatpush.msra.mxu0 %v112
    %301 = vmatpush.msra.mxu0 %v111
    %302 = vmatpush.msra.mxu0 %v110
    %303 = vmatpush.msra.mxu0 %v109
    %304 = vmatpush.msra.mxu0 %v108
    %305 = vmatpush.msra.mxu0 %v107
    %306 = vmatpush.msra.mxu0 %v106
    %307 = vmatpush.msra.mxu0 %v105
    %308 = vmatpush.msra.mxu0 %v104
    %309 = vmatpush.msra.mxu0 %v103
    %310 = vmatmul.f32.gmra.mxu0 %v183
    %v311 = vpop.f32.mrf.mxu0
    %v312 = vadd.f32 %v292, %v311
    %313 = vdwg.mxu0
    %314 = vmatpush.msra.mxu0 %v134
    %315 = vmatpush.msra.mxu0 %v133
    %316 = vmatpush.msra.mxu0 %v132
    %317 = vmatpush.msra.mxu0 %v131
    %318 = vmatpush.msra.mxu0 %v130
    %319 = vmatpush.msra.mxu0 %v129
    %320 = vmatpush.msra.mxu0 %v128
    %321 = vmatpush.msra.mxu0 %v127
    %322 = vmatpush.msra.mxu0 %v126
    %323 = vmatpush.msra.mxu0 %v125
    %324 = vmatpush.msra.mxu0 %v124
    %325 = vmatpush.msra.mxu0 %v123
    %326 = vmatpush.msra.mxu0 %v122
    %327 = vmatpush.msra.mxu0 %v121
    %328 = vmatpush.msra.mxu0 %v120
    %329 = vmatpush.msra.mxu0 %v119
    %330 = vmatmul.f32.gmra.mxu0 %v184
    %v331 = vpop.f32.mrf.mxu0
    %v332 = vadd.f32 %v312, %v331
    %333 = vdwg.mxu0
    %334 = vmatpush.msra.mxu0 %v150
    %335 = vmatpush.msra.mxu0 %v149
    %336 = vmatpush.msra.mxu0 %v148
    %337 = vmatpush.msra.mxu0 %v147
    %338 = vmatpush.msra.mxu0 %v146
    %339 = vmatpush.msra.mxu0 %v145
    %340 = vmatpush.msra.mxu0 %v144
    %341 = vmatpush.msra.mxu0 %v143
    %342 = vmatpush.msra.mxu0 %v142
    %343 = vmatpush.msra.mxu0 %v141
    %344 = vmatpush.msra.mxu0 %v140
    %345 = vmatpush.msra.mxu0 %v139
    %346 = vmatpush.msra.mxu0 %v138
    %347 = vmatpush.msra.mxu0 %v137
    %348 = vmatpush.msra.mxu0 %v136
    %349 = vmatpush.msra.mxu0 %v135
    %350 = vmatmul.f32.gmra.mxu0 %v185
    %v351 = vpop.f32.mrf.mxu0
    %v352 = vadd.f32 %v332, %v351
    %353 = vdwg.mxu0
    %vm354 = vcmask 64512
    %v355 = vsel %vm354, %v352, -inf
    %356 = vmax.xlane.f32.xlu0 %v355
    %v357 = vpop.xlane.xlu0 %356
    %v358 = vsub.f32 %v352, %v357
    %v359 = vmul.f32 %v358, 1.442695
    %v360 = vpow.pop %v359
    %v361 = vsel %vm354, %v360, 0.0
    %362 = vadd.xlane.f32.xlu0 %v361
    %v363 = vpop.xlane.xlu0 %362
    %v364 = vlog2.pop %v363
    %v365 = vmul.f32 %v364, 0.6931472
    %v366 = vsub.f32 %v358, %v365
    %367 = vst.msk [vmem:[#allocation2] sm:$0xff] %vm354, %v366
    // Predicated region
    $region14: #{tpu_custom_call.1} parent=1 // pred_check
      _
    $region15: #{tpu_custom_call.1} parent=1 // pred_check_branch
      %369 = sbr.rel (0) target = $region17
    $region16: #{tpu_custom_call.1} parent=1 // pred_region
      %371 = vsyncadd [#allocation3], 96
      %s372 = sshll.u32 [#allocation2], 4
      %s373 = int_to_ptr.vmem [resolvable:$true] %s372
      %s374 = sshll.u32 %s3, 4
      %s375 = int_to_ptr.hbm [resolvable:$true] %s374
      %380 = dma.vmem_to_hbm [thread:$0]  %s373, 32, %s375, [#allocation3], 32, 32, 2
    $region17: #{tpu_custom_call.1} parent=1 // pred_fallthru
      _
    // Predicated region
    $region18: #{tpu_custom_call.1} parent=1 // pred_check
      _
    $region19: #{tpu_custom_call.1} parent=1 // pred_check_branch
      %382 = sbr.rel (0) target = $region21
    $region20: #{tpu_custom_call.1} parent=1 // pred_region
      %384 = dma.done [#allocation3], 128
    $region21: #{tpu_custom_call.1} parent=1 // pred_fallthru
      _
    %385 = vsyncpa [#allocation3], 1

</llo_original>
